<compile_context>
chip_gen: v7x
topology: tpu7x:2x2x1
jax: 0.10.0
libtpu: 0.0.40
codegen_flags: <defaults>
</compile_context>

<pallas_src>
import jax
import jax.numpy as jnp
from jax.experimental import pallas as pl
from jax.experimental.pallas import tpu as pltpu

IN_FEATURES = 2
HIDDEN = 10


def _round_up(x, m):
    return ((x + m - 1) // m) * m


def value_model_kernel(w1_ref, b1_ref, w2_ref, b2_ref, x_ref, o_ref):
    # Scalar-prefetch (SMEM) refs:
    #   w1_ref: (20,)  flattened (10, 2) fc1 weight, row-major -> [j,k] = 2j+k
    #   b1_ref: (10,)  fc1 bias
    #   w2_ref: (10,)  fc2 weight (1, 10) flattened
    #   b2_ref: (1,)   fc2 bias
    # Tiled VMEM refs:
    #   x_ref:  (2, TB)  batch on lanes
    #   o_ref:  (1, TB)
    x0 = x_ref[0:1, :].astype(jnp.float32)   # (1, TB)
    x1 = x_ref[1:2, :].astype(jnp.float32)   # (1, TB)

    acc = jnp.zeros_like(x0)
    # Fully unrolled static loop: 10 (scalar * vector) FMAs + EUP tanh per term.
    for j in range(HIDDEN):
        h_j = jnp.tanh(w1_ref[2 * j] * x0 + w1_ref[2 * j + 1] * x1 + b1_ref[j])
        acc = acc + w2_ref[j] * h_j

    o_ref[...] = (acc + b2_ref[0]).astype(o_ref.dtype)


def value_model_forward(x, w1, b1, w2, b2, *, block_b=32768):
    """x: (B, 2) float32.  w1: (10, 2), b1: (10,), w2: (1, 10), b2: (1,).

    Returns (B, 1) float32, matching PyTorch nn.Linear semantics.
    """
    B = x.shape[0]
    xt = x.astype(jnp.float32).T                       # (2, B): batch -> lanes

    # Lane-align the batch and pick the tile size (sweepable; tiny VMEM cost).
    TB = min(block_b, _round_up(B, 128))
    Bp = _round_up(B, TB)
    if Bp != B:
        xt = jnp.pad(xt, ((0, 0), (0, Bp - B)))
    n_blocks = Bp // TB

    # Scalars for SMEM prefetch.
    w1_flat = w1.reshape(-1).astype(jnp.float32)       # (20,)
    b1_f = b1.reshape(-1).astype(jnp.float32)          # (10,)
    w2_flat = w2.reshape(-1).astype(jnp.float32)       # (10,)
    b2_f = b2.reshape(-1).astype(jnp.float32)          # (1,)

    cost = pl.CostEstimate(
        flops=2 * (IN_FEATURES * HIDDEN + HIDDEN) * B,
        transcendentals=HIDDEN * B,
        bytes_accessed=(IN_FEATURES + 1) * 4 * B,
    )

    out_t = pl.pallas_call(
        value_model_kernel,
        out_shape=jax.ShapeDtypeStruct((1, Bp), jnp.float32),
        grid_spec=pltpu.PrefetchScalarGridSpec(
            num_scalar_prefetch=4,
            grid=(n_blocks,),
            in_specs=[
                pl.BlockSpec((IN_FEATURES, TB), lambda i, *_: (0, i)),
            ],
            out_specs=pl.BlockSpec((1, TB), lambda i, *_: (0, i)),
        ),
        compiler_params=pltpu.CompilerParams(
            dimension_semantics=("parallel",),
        ),
        cost_estimate=cost,
    )(w1_flat, b1_f, w2_flat, b2_f, xt)

    # Back to PyTorch layout (B, 1), dropping lane padding.
    return out_t[0, :B].reshape(B, 1)


def init_params(key):
    """Deterministic xavier-normal init mirroring the PyTorch __init__."""
    k1, k2 = jax.random.split(key, 2)

    def xavier_normal(k, shape, gain):
        fan_out, fan_in = shape  # nn.Linear weight is (out_features, in_features)
        std = gain * (2.0 / (fan_in + fan_out)) ** 0.5
        return std * jax.random.normal(k, shape, dtype=jnp.float32)

    tanh_gain = 5.0 / 3.0   # nn.init.calculate_gain('tanh')
    lin_gain = 1.0          # nn.init.calculate_gain('linear')

    w1 = xavier_normal(k1, (HIDDEN, IN_FEATURES), tanh_gain)
    b1 = jnp.zeros((HIDDEN,), jnp.float32)
    w2 = xavier_normal(k2, (1, HIDDEN), lin_gain)
    b2 = jnp.zeros((1,), jnp.float32)
    return w1, b1, w2, b2


if __name__ == "__main__":
    key = jax.random.PRNGKey(0)
    k_params, k_x1, k_x2 = jax.random.split(key, 3)

    w1, b1, w2, b2 = init_params(k_params)

    def ref_fn(x):
        return jnp.tanh(x @ w1.T + b1) @ w2.T + b2

    # Small batch (single grid step, padded to one 128-lane tile).
    batch = 8
    x = jax.random.normal(k_x1, (batch, IN_FEATURES), dtype=jnp.float32)
    out = value_model_forward(x, w1, b1, w2, b2)
    out = jax.block_until_ready(out)
    assert out.shape == (batch, 1)
    assert jnp.allclose(out, ref_fn(x), atol=1e-5, rtol=1e-5)

    # Larger, non-aligned batch with a small tile to exercise the multi-step
    # pipelined grid and the padding path.
    batch2 = 300
    x2 = jax.random.normal(k_x2, (batch2, IN_FEATURES), dtype=jnp.float32)
    out2 = value_model_forward(x2, w1, b1, w2, b2, block_b=128)
    out2 = jax.block_until_ready(out2)
    assert out2.shape == (batch2, 1)
    assert jnp.allclose(out2, ref_fn(x2), atol=1e-5, rtol=1e-5)

    print("KERNEL_OK")
</pallas_src>

<mosaic_0001>
module attributes {stable_mosaic.version = 11 : i64} {
  func.func @value_model_kernel(%arg0: i32, %arg1: memref<20xf32, #tpu.memory_space<smem>>, %arg2: memref<10xf32, #tpu.memory_space<smem>>, %arg3: memref<10xf32, #tpu.memory_space<smem>>, %arg4: memref<1xf32, #tpu.memory_space<smem>>, %arg5: memref<2x128xf32, #tpu.memory_space<vmem>>, %arg6: memref<1x128xf32, #tpu.memory_space<vmem>>) attributes {dimension_semantics = [#tpu.dimension_semantics<parallel>], iteration_bounds = array<i64: 1>, scalar_prefetch = 4 : i64, scratch_operands = 0 : i64, tpu.core_type = #tpu.core_type<tc>, window_params = [{transform_indices = @transform_0, window_bounds = array<i64: 2, 128>}, {transform_indices = @transform_1, window_bounds = array<i64: 1, 128>}]} {
    %c0 = arith.constant 0 : index
    %c0_0 = arith.constant 0 : index
    %0 = vector.load %arg5[%c0, %c0_0] : memref<2x128xf32, #tpu.memory_space<vmem>>, vector<1x128xf32>
    %c1 = arith.constant 1 : index
    %c0_1 = arith.constant 0 : index
    %1 = vector.load %arg5[%c1, %c0_1] : memref<2x128xf32, #tpu.memory_space<vmem>>, vector<1x128xf32>
    %cst = arith.constant 0.000000e+00 : f32
    %2 = vector.broadcast %cst : f32 to vector<1x128xf32>
    %c0_2 = arith.constant 0 : index
    %3 = memref.load %arg1[%c0_2] : memref<20xf32, #tpu.memory_space<smem>>
    %4 = vector.broadcast %3 : f32 to vector<1x128xf32>
    %5 = arith.mulf %4, %0 : vector<1x128xf32>
    %c1_3 = arith.constant 1 : index
    %6 = memref.load %arg1[%c1_3] : memref<20xf32, #tpu.memory_space<smem>>
    %7 = vector.broadcast %6 : f32 to vector<1x128xf32>
    %8 = arith.mulf %7, %1 : vector<1x128xf32>
    %9 = arith.addf %5, %8 : vector<1x128xf32>
    %c0_4 = arith.constant 0 : index
    %10 = memref.load %arg2[%c0_4] : memref<10xf32, #tpu.memory_space<smem>>
    %11 = vector.broadcast %10 : f32 to vector<1x128xf32>
    %12 = arith.addf %9, %11 : vector<1x128xf32>
    %13 = math.tanh %12 : vector<1x128xf32>
    %c0_5 = arith.constant 0 : index
    %14 = memref.load %arg3[%c0_5] : memref<10xf32, #tpu.memory_space<smem>>
    %15 = vector.broadcast %14 : f32 to vector<1x128xf32>
    %16 = arith.mulf %15, %13 : vector<1x128xf32>
    %17 = arith.addf %2, %16 : vector<1x128xf32>
    %c2 = arith.constant 2 : index
    %18 = memref.load %arg1[%c2] : memref<20xf32, #tpu.memory_space<smem>>
    %19 = vector.broadcast %18 : f32 to vector<1x128xf32>
    %20 = arith.mulf %19, %0 : vector<1x128xf32>
    %c3 = arith.constant 3 : index
    %21 = memref.load %arg1[%c3] : memref<20xf32, #tpu.memory_space<smem>>
    %22 = vector.broadcast %21 : f32 to vector<1x128xf32>
    %23 = arith.mulf %22, %1 : vector<1x128xf32>
    %24 = arith.addf %20, %23 : vector<1x128xf32>
    %c1_6 = arith.constant 1 : index
    %25 = memref.load %arg2[%c1_6] : memref<10xf32, #tpu.memory_space<smem>>
    %26 = vector.broadcast %25 : f32 to vector<1x128xf32>
    %27 = arith.addf %24, %26 : vector<1x128xf32>
    %28 = math.tanh %27 : vector<1x128xf32>
    %c1_7 = arith.constant 1 : index
    %29 = memref.load %arg3[%c1_7] : memref<10xf32, #tpu.memory_space<smem>>
    %30 = vector.broadcast %29 : f32 to vector<1x128xf32>
    %31 = arith.mulf %30, %28 : vector<1x128xf32>
    %32 = arith.addf %17, %31 : vector<1x128xf32>
    %c4 = arith.constant 4 : index
    %33 = memref.load %arg1[%c4] : memref<20xf32, #tpu.memory_space<smem>>
    %34 = vector.broadcast %33 : f32 to vector<1x128xf32>
    %35 = arith.mulf %34, %0 : vector<1x128xf32>
    %c5 = arith.constant 5 : index
    %36 = memref.load %arg1[%c5] : memref<20xf32, #tpu.memory_space<smem>>
    %37 = vector.broadcast %36 : f32 to vector<1x128xf32>
    %38 = arith.mulf %37, %1 : vector<1x128xf32>
    %39 = arith.addf %35, %38 : vector<1x128xf32>
    %c2_8 = arith.constant 2 : index
    %40 = memref.load %arg2[%c2_8] : memref<10xf32, #tpu.memory_space<smem>>
    %41 = vector.broadcast %40 : f32 to vector<1x128xf32>
    %42 = arith.addf %39, %41 : vector<1x128xf32>
    %43 = math.tanh %42 : vector<1x128xf32>
    %c2_9 = arith.constant 2 : index
    %44 = memref.load %arg3[%c2_9] : memref<10xf32, #tpu.memory_space<smem>>
    %45 = vector.broadcast %44 : f32 to vector<1x128xf32>
    %46 = arith.mulf %45, %43 : vector<1x128xf32>
    %47 = arith.addf %32, %46 : vector<1x128xf32>
    %c6 = arith.constant 6 : index
    %48 = memref.load %arg1[%c6] : memref<20xf32, #tpu.memory_space<smem>>
    %49 = vector.broadcast %48 : f32 to vector<1x128xf32>
    %50 = arith.mulf %49, %0 : vector<1x128xf32>
    %c7 = arith.constant 7 : index
    %51 = memref.load %arg1[%c7] : memref<20xf32, #tpu.memory_space<smem>>
    %52 = vector.broadcast %51 : f32 to vector<1x128xf32>
    %53 = arith.mulf %52, %1 : vector<1x128xf32>
    %54 = arith.addf %50, %53 : vector<1x128xf32>
    %c3_10 = arith.constant 3 : index
    %55 = memref.load %arg2[%c3_10] : memref<10xf32, #tpu.memory_space<smem>>
    %56 = vector.broadcast %55 : f32 to vector<1x128xf32>
    %57 = arith.addf %54, %56 : vector<1x128xf32>
    %58 = math.tanh %57 : vector<1x128xf32>
    %c3_11 = arith.constant 3 : index
    %59 = memref.load %arg3[%c3_11] : memref<10xf32, #tpu.memory_space<smem>>
    %60 = vector.broadcast %59 : f32 to vector<1x128xf32>
    %61 = arith.mulf %60, %58 : vector<1x128xf32>
    %62 = arith.addf %47, %61 : vector<1x128xf32>
    %c8 = arith.constant 8 : index
    %63 = memref.load %arg1[%c8] : memref<20xf32, #tpu.memory_space<smem>>
    %64 = vector.broadcast %63 : f32 to vector<1x128xf32>
    %65 = arith.mulf %64, %0 : vector<1x128xf32>
    %c9 = arith.constant 9 : index
    %66 = memref.load %arg1[%c9] : memref<20xf32, #tpu.memory_space<smem>>
    %67 = vector.broadcast %66 : f32 to vector<1x128xf32>
    %68 = arith.mulf %67, %1 : vector<1x128xf32>
    %69 = arith.addf %65, %68 : vector<1x128xf32>
    %c4_12 = arith.constant 4 : index
    %70 = memref.load %arg2[%c4_12] : memref<10xf32, #tpu.memory_space<smem>>
    %71 = vector.broadcast %70 : f32 to vector<1x128xf32>
    %72 = arith.addf %69, %71 : vector<1x128xf32>
    %73 = math.tanh %72 : vector<1x128xf32>
    %c4_13 = arith.constant 4 : index
    %74 = memref.load %arg3[%c4_13] : memref<10xf32, #tpu.memory_space<smem>>
    %75 = vector.broadcast %74 : f32 to vector<1x128xf32>
    %76 = arith.mulf %75, %73 : vector<1x128xf32>
    %77 = arith.addf %62, %76 : vector<1x128xf32>
    %c10 = arith.constant 10 : index
    %78 = memref.load %arg1[%c10] : memref<20xf32, #tpu.memory_space<smem>>
    %79 = vector.broadcast %78 : f32 to vector<1x128xf32>
    %80 = arith.mulf %79, %0 : vector<1x128xf32>
    %c11 = arith.constant 11 : index
    %81 = memref.load %arg1[%c11] : memref<20xf32, #tpu.memory_space<smem>>
    %82 = vector.broadcast %81 : f32 to vector<1x128xf32>
    %83 = arith.mulf %82, %1 : vector<1x128xf32>
    %84 = arith.addf %80, %83 : vector<1x128xf32>
    %c5_14 = arith.constant 5 : index
    %85 = memref.load %arg2[%c5_14] : memref<10xf32, #tpu.memory_space<smem>>
    %86 = vector.broadcast %85 : f32 to vector<1x128xf32>
    %87 = arith.addf %84, %86 : vector<1x128xf32>
    %88 = math.tanh %87 : vector<1x128xf32>
    %c5_15 = arith.constant 5 : index
    %89 = memref.load %arg3[%c5_15] : memref<10xf32, #tpu.memory_space<smem>>
    %90 = vector.broadcast %89 : f32 to vector<1x128xf32>
    %91 = arith.mulf %90, %88 : vector<1x128xf32>
    %92 = arith.addf %77, %91 : vector<1x128xf32>
    %c12 = arith.constant 12 : index
    %93 = memref.load %arg1[%c12] : memref<20xf32, #tpu.memory_space<smem>>
    %94 = vector.broadcast %93 : f32 to vector<1x128xf32>
    %95 = arith.mulf %94, %0 : vector<1x128xf32>
    %c13 = arith.constant 13 : index
    %96 = memref.load %arg1[%c13] : memref<20xf32, #tpu.memory_space<smem>>
    %97 = vector.broadcast %96 : f32 to vector<1x128xf32>
    %98 = arith.mulf %97, %1 : vector<1x128xf32>
    %99 = arith.addf %95, %98 : vector<1x128xf32>
    %c6_16 = arith.constant 6 : index
    %100 = memref.load %arg2[%c6_16] : memref<10xf32, #tpu.memory_space<smem>>
    %101 = vector.broadcast %100 : f32 to vector<1x128xf32>
    %102 = arith.addf %99, %101 : vector<1x128xf32>
    %103 = math.tanh %102 : vector<1x128xf32>
    %c6_17 = arith.constant 6 : index
    %104 = memref.load %arg3[%c6_17] : memref<10xf32, #tpu.memory_space<smem>>
    %105 = vector.broadcast %104 : f32 to vector<1x128xf32>
    %106 = arith.mulf %105, %103 : vector<1x128xf32>
    %107 = arith.addf %92, %106 : vector<1x128xf32>
    %c14 = arith.constant 14 : index
    %108 = memref.load %arg1[%c14] : memref<20xf32, #tpu.memory_space<smem>>
    %109 = vector.broadcast %108 : f32 to vector<1x128xf32>
    %110 = arith.mulf %109, %0 : vector<1x128xf32>
    %c15 = arith.constant 15 : index
    %111 = memref.load %arg1[%c15] : memref<20xf32, #tpu.memory_space<smem>>
    %112 = vector.broadcast %111 : f32 to vector<1x128xf32>
    %113 = arith.mulf %112, %1 : vector<1x128xf32>
    %114 = arith.addf %110, %113 : vector<1x128xf32>
    %c7_18 = arith.constant 7 : index
    %115 = memref.load %arg2[%c7_18] : memref<10xf32, #tpu.memory_space<smem>>
    %116 = vector.broadcast %115 : f32 to vector<1x128xf32>
    %117 = arith.addf %114, %116 : vector<1x128xf32>
    %118 = math.tanh %117 : vector<1x128xf32>
    %c7_19 = arith.constant 7 : index
    %119 = memref.load %arg3[%c7_19] : memref<10xf32, #tpu.memory_space<smem>>
    %120 = vector.broadcast %119 : f32 to vector<1x128xf32>
    %121 = arith.mulf %120, %118 : vector<1x128xf32>
    %122 = arith.addf %107, %121 : vector<1x128xf32>
    %c16 = arith.constant 16 : index
    %123 = memref.load %arg1[%c16] : memref<20xf32, #tpu.memory_space<smem>>
    %124 = vector.broadcast %123 : f32 to vector<1x128xf32>
    %125 = arith.mulf %124, %0 : vector<1x128xf32>
    %c17 = arith.constant 17 : index
    %126 = memref.load %arg1[%c17] : memref<20xf32, #tpu.memory_space<smem>>
    %127 = vector.broadcast %126 : f32 to vector<1x128xf32>
    %128 = arith.mulf %127, %1 : vector<1x128xf32>
    %129 = arith.addf %125, %128 : vector<1x128xf32>
    %c8_20 = arith.constant 8 : index
    %130 = memref.load %arg2[%c8_20] : memref<10xf32, #tpu.memory_space<smem>>
    %131 = vector.broadcast %130 : f32 to vector<1x128xf32>
    %132 = arith.addf %129, %131 : vector<1x128xf32>
    %133 = math.tanh %132 : vector<1x128xf32>
    %c8_21 = arith.constant 8 : index
    %134 = memref.load %arg3[%c8_21] : memref<10xf32, #tpu.memory_space<smem>>
    %135 = vector.broadcast %134 : f32 to vector<1x128xf32>
    %136 = arith.mulf %135, %133 : vector<1x128xf32>
    %137 = arith.addf %122, %136 : vector<1x128xf32>
    %c18 = arith.constant 18 : index
    %138 = memref.load %arg1[%c18] : memref<20xf32, #tpu.memory_space<smem>>
    %139 = vector.broadcast %138 : f32 to vector<1x128xf32>
    %140 = arith.mulf %139, %0 : vector<1x128xf32>
    %c19 = arith.constant 19 : index
    %141 = memref.load %arg1[%c19] : memref<20xf32, #tpu.memory_space<smem>>
    %142 = vector.broadcast %141 : f32 to vector<1x128xf32>
    %143 = arith.mulf %142, %1 : vector<1x128xf32>
    %144 = arith.addf %140, %143 : vector<1x128xf32>
    %c9_22 = arith.constant 9 : index
    %145 = memref.load %arg2[%c9_22] : memref<10xf32, #tpu.memory_space<smem>>
    %146 = vector.broadcast %145 : f32 to vector<1x128xf32>
    %147 = arith.addf %144, %146 : vector<1x128xf32>
    %148 = math.tanh %147 : vector<1x128xf32>
    %c9_23 = arith.constant 9 : index
    %149 = memref.load %arg3[%c9_23] : memref<10xf32, #tpu.memory_space<smem>>
    %150 = vector.broadcast %149 : f32 to vector<1x128xf32>
    %151 = arith.mulf %150, %148 : vector<1x128xf32>
    %152 = arith.addf %137, %151 : vector<1x128xf32>
    %c0_24 = arith.constant 0 : index
    %153 = memref.load %arg4[%c0_24] : memref<1xf32, #tpu.memory_space<smem>>
    %154 = vector.broadcast %153 : f32 to vector<1x128xf32>
    %155 = arith.addf %152, %154 : vector<1x128xf32>
    %c0_25 = arith.constant 0 : index
    %c0_26 = arith.constant 0 : index
    %156 = vector.load %arg6[%c0_25, %c0_26] : memref<1x128xf32, #tpu.memory_space<vmem>>, vector<1x128xf32>
    tpu.vector_store %arg6[%c0_25, %c0_26], %155 {strides = array<i32>} : memref<1x128xf32, #tpu.memory_space<vmem>>, vector<1x128xf32>,
    return
  }
  func.func @transform_0(%arg0: i32, %arg1: memref<20xf32, #tpu.memory_space<smem>>, %arg2: memref<10xf32, #tpu.memory_space<smem>>, %arg3: memref<10xf32, #tpu.memory_space<smem>>, %arg4: memref<1xf32, #tpu.memory_space<smem>>) -> (i32, i32) {
    %c0_i32 = arith.constant 0 : i32
    %c0_i32_0 = arith.constant 0 : i32
    return %c0_i32, %arg0 : i32, i32
  }
  func.func @transform_1(%arg0: i32, %arg1: memref<20xf32, #tpu.memory_space<smem>>, %arg2: memref<10xf32, #tpu.memory_space<smem>>, %arg3: memref<10xf32, #tpu.memory_space<smem>>, %arg4: memref<1xf32, #tpu.memory_space<smem>>) -> (i32, i32) {
    %c0_i32 = arith.constant 0 : i32
    %c0_i32_0 = arith.constant 0 : i32
    return %c0_i32, %arg0 : i32, i32
  }
}

</mosaic_0001>

<llo_original>
// kernel: tpu_custom_call.1
$region0: #{tpu_custom_call.1}
  #allocation0 [shape = 'u32[]', space=smem, size = 0x4, offset = 0x4, fixed_abs, tag = 'smem constant byte address 0x4 - core index']
  #allocation1 [shape = 'u32[144,128]{1,0:T(1,128)}', space=vmem, size = 0x12000, scoped, tag = 'internal scratch']
  #allocation2 [shape = 's32[1]{0}', space=sflag, size = 0x4, scoped, tag = 'scoped memory for tpu_custom_call.1']
  #allocation3 [shape = 'u8[512]{0}', space=smem, size = 0x200, scoped, tag = 'prefetched SMEM operand 0']
  #allocation4 [shape = 'u8[512]{0}', space=smem, size = 0x200, scoped, tag = 'prefetched SMEM operand 1']
  #allocation5 [shape = 'u8[512]{0}', space=smem, size = 0x200, scoped, tag = 'prefetched SMEM operand 2']
  #allocation6 [shape = 'f32[1]{0:T(128)S(6)}', space=smem, size = 0x200, scoped, tag = 'prefetched SMEM operand 3']
  %s0 = inlined_call_operand.vmem [shape: f32[20], index: 0, kind: input, shape index: {}]
  %s1 = inlined_call_operand.vmem [shape: f32[10], index: 1, kind: input, shape index: {}]
  %s2 = inlined_call_operand.vmem [shape: f32[10], index: 2, kind: input, shape index: {}]
  %s3 = inlined_call_operand.<no memory space> [shape: f32[1], index: 3, kind: input, shape index: {}]
  %s4 = inlined_call_operand.vmem [shape: f32[2,128], index: 4, kind: input, shape index: {}]
  %s5 = inlined_call_operand.hbm [shape: f32[1,128], index: 5, kind: output, shape index: {}]
  %s6 = sld [smem:[#allocation0]]
  $region14: #{tpu_custom_call.1} parent=0
    _
  %s8 = ssub.s32 1, %s6
  %s9 = scalar_select 0, %s8, %s6
  %s10 = sshll.u32 %s0, 4
  %s11 = int_to_ptr.vmem [resolvable:$true] %s10
  %13 = dma.vmem_to_smem %s11, 16, [#allocation3], [#allocation2]
  %s14 = sshll.u32 %s1, 4
  %s15 = int_to_ptr.vmem [resolvable:$true] %s14
  %17 = dma.vmem_to_smem %s15, 16, [#allocation4], [#allocation2]
  %s18 = sshll.u32 %s2, 4
  %s19 = int_to_ptr.vmem [resolvable:$true] %s18
  %21 = dma.vmem_to_smem %s19, 16, [#allocation5], [#allocation2]
  %22 = sst [smem:[#allocation6]] %s3
  %23 = dma.done [#allocation2], 48
  %24 = sfence
  $region1: #{tpu_custom_call.1} parent=0
    #allocation7 [shape = 'u8[512]{0}', space=vmem, size = 0x400, scoped, tag = 'output window, operand 0, single buffered']
    #allocation8 [shape = 's32[1]{0}', space=sflag, size = 0x4, scoped, tag = 'scoped memory for tpu_custom_call.1']
    %25 = vsyncpa [#allocation8], 0
    // Predicated region
    $region2: #{tpu_custom_call.1} parent=1 // pred_check
      _
    $region3: #{tpu_custom_call.1} parent=1 // pred_check_branch
      %27 = sbr.rel (0) target = $region5
    $region4: #{tpu_custom_call.1} parent=1 // pred_region
      _
    $region5: #{tpu_custom_call.1} parent=1 // pred_fallthru
      _
    %v28 = vld [vmem:[%s4] sm:$0x1]
    %v29 = vld [vmem:[%s4 + $0x1] sm:$0x1]
    %s30 = sld [smem:[#allocation3]]
    %v31 = vstv %s30
    %v32 = vmul.f32 %v31, %v28
    %s33 = sld [smem:[#allocation3 + $0x1]]
    %v34 = vstv %s33
    %v35 = vmul.f32 %v34, %v29
    %v36 = vadd.f32 %v32, %v35
    %s37 = sld [smem:[#allocation4]]
    %v38 = vstv %s37
    %v39 = vadd.f32 %v36, %v38
    %v40 = vtanh.pop %v39
    %s41 = sld [smem:[#allocation5]]
    %v42 = vstv %s41
    %v43 = vmul.f32 %v42, %v40
    %v44 = vadd.f32 %v43, 0.0
    %s45 = sld [smem:[#allocation3 + $0x2]]
    %v46 = vstv %s45
    %v47 = vmul.f32 %v46, %v28
    %s48 = sld [smem:[#allocation3 + $0x3]]
    %v49 = vstv %s48
    %v50 = vmul.f32 %v49, %v29
    %v51 = vadd.f32 %v47, %v50
    %s52 = sld [smem:[#allocation4 + $0x1]]
    %v53 = vstv %s52
    %v54 = vadd.f32 %v51, %v53
    %v55 = vtanh.pop %v54
    %s56 = sld [smem:[#allocation5 + $0x1]]
    %v57 = vstv %s56
    %v58 = vmul.f32 %v57, %v55
    %v59 = vadd.f32 %v44, %v58
    %s60 = sld [smem:[#allocation3 + $0x4]]
    %v61 = vstv %s60
    %v62 = vmul.f32 %v61, %v28
    %s63 = sld [smem:[#allocation3 + $0x5]]
    %v64 = vstv %s63
    %v65 = vmul.f32 %v64, %v29
    %v66 = vadd.f32 %v62, %v65
    %s67 = sld [smem:[#allocation4 + $0x2]]
    %v68 = vstv %s67
    %v69 = vadd.f32 %v66, %v68
    %v70 = vtanh.pop %v69
    %s71 = sld [smem:[#allocation5 + $0x2]]
    %v72 = vstv %s71
    %v73 = vmul.f32 %v72, %v70
    %v74 = vadd.f32 %v59, %v73
    %s75 = sld [smem:[#allocation3 + $0x6]]
    %v76 = vstv %s75
    %v77 = vmul.f32 %v76, %v28
    %s78 = sld [smem:[#allocation3 + $0x7]]
    %v79 = vstv %s78
    %v80 = vmul.f32 %v79, %v29
    %v81 = vadd.f32 %v77, %v80
    %s82 = sld [smem:[#allocation4 + $0x3]]
    %v83 = vstv %s82
    %v84 = vadd.f32 %v81, %v83
    %v85 = vtanh.pop %v84
    %s86 = sld [smem:[#allocation5 + $0x3]]
    %v87 = vstv %s86
    %v88 = vmul.f32 %v87, %v85
    %v89 = vadd.f32 %v74, %v88
    %s90 = sld [smem:[#allocation3 + $0x8]]
    %v91 = vstv %s90
    %v92 = vmul.f32 %v91, %v28
    %s93 = sld [smem:[#allocation3 + $0x9]]
    %v94 = vstv %s93
    %v95 = vmul.f32 %v94, %v29
    %v96 = vadd.f32 %v92, %v95
    %s97 = sld [smem:[#allocation4 + $0x4]]
    %v98 = vstv %s97
    %v99 = vadd.f32 %v96, %v98
    %v100 = vtanh.pop %v99
    %s101 = sld [smem:[#allocation5 + $0x4]]
    %v102 = vstv %s101
    %v103 = vmul.f32 %v102, %v100
    %v104 = vadd.f32 %v89, %v103
    %s105 = sld [smem:[#allocation3 + $0xa]]
    %v106 = vstv %s105
    %v107 = vmul.f32 %v106, %v28
    %s108 = sld [smem:[#allocation3 + $0xb]]
    %v109 = vstv %s108
    %v110 = vmul.f32 %v109, %v29
    %v111 = vadd.f32 %v107, %v110
    %s112 = sld [smem:[#allocation4 + $0x5]]
    %v113 = vstv %s112
    %v114 = vadd.f32 %v111, %v113
    %v115 = vtanh.pop %v114
    %s116 = sld [smem:[#allocation5 + $0x5]]
    %v117 = vstv %s116
    %v118 = vmul.f32 %v117, %v115
    %v119 = vadd.f32 %v104, %v118
    %s120 = sld [smem:[#allocation3 + $0xc]]
    %v121 = vstv %s120
    %v122 = vmul.f32 %v121, %v28
    %s123 = sld [smem:[#allocation3 + $0xd]]
    %v124 = vstv %s123
    %v125 = vmul.f32 %v124, %v29
    %v126 = vadd.f32 %v122, %v125
    %s127 = sld [smem:[#allocation4 + $0x6]]
    %v128 = vstv %s127
    %v129 = vadd.f32 %v126, %v128
    %v130 = vtanh.pop %v129
    %s131 = sld [smem:[#allocation5 + $0x6]]
    %v132 = vstv %s131
    %v133 = vmul.f32 %v132, %v130
    %v134 = vadd.f32 %v119, %v133
    %s135 = sld [smem:[#allocation3 + $0xe]]
    %v136 = vstv %s135
    %v137 = vmul.f32 %v136, %v28
    %s138 = sld [smem:[#allocation3 + $0xf]]
    %v139 = vstv %s138
    %v140 = vmul.f32 %v139, %v29
    %v141 = vadd.f32 %v137, %v140
    %s142 = sld [smem:[#allocation4 + $0x7]]
    %v143 = vstv %s142
    %v144 = vadd.f32 %v141, %v143
    %v145 = vtanh.pop %v144
    %s146 = sld [smem:[#allocation5 + $0x7]]
    %v147 = vstv %s146
    %v148 = vmul.f32 %v147, %v145
    %v149 = vadd.f32 %v134, %v148
    %s150 = sld [smem:[#allocation3 + $0x10]]
    %v151 = vstv %s150
    %v152 = vmul.f32 %v151, %v28
    %s153 = sld [smem:[#allocation3 + $0x11]]
    %v154 = vstv %s153
    %v155 = vmul.f32 %v154, %v29
    %v156 = vadd.f32 %v152, %v155
    %s157 = sld [smem:[#allocation4 + $0x8]]
    %v158 = vstv %s157
    %v159 = vadd.f32 %v156, %v158
    %v160 = vtanh.pop %v159
    %s161 = sld [smem:[#allocation5 + $0x8]]
    %v162 = vstv %s161
    %v163 = vmul.f32 %v162, %v160
    %v164 = vadd.f32 %v149, %v163
    %s165 = sld [smem:[#allocation3 + $0x12]]
    %v166 = vstv %s165
    %v167 = vmul.f32 %v166, %v28
    %s168 = sld [smem:[#allocation3 + $0x13]]
    %v169 = vstv %s168
    %v170 = vmul.f32 %v169, %v29
    %v171 = vadd.f32 %v167, %v170
    %s172 = sld [smem:[#allocation4 + $0x9]]
    %v173 = vstv %s172
    %v174 = vadd.f32 %v171, %v173
    %v175 = vtanh.pop %v174
    %s176 = sld [smem:[#allocation5 + $0x9]]
    %v177 = vstv %s176
    %v178 = vmul.f32 %v177, %v175
    %v179 = vadd.f32 %v164, %v178
    %s180 = sld [smem:[#allocation6]]
    %v181 = vstv %s180
    %v182 = vadd.f32 %v179, %v181
    %183 = vst [vmem:[#allocation7] sm:$0x1] %v182
    // Predicated region
    $region6: #{tpu_custom_call.1} parent=1 // pred_check
      _
    $region7: #{tpu_custom_call.1} parent=1 // pred_check_branch
      %185 = sbr.rel (0) target = $region9
    $region8: #{tpu_custom_call.1} parent=1 // pred_region
      %s187 = ssub.s32 16, 16
      %188 = vsyncadd [#allocation8], %s187
      %s190 = sshll.u32 [#allocation7], 4
      %s191 = int_to_ptr.vmem [resolvable:$true] %s190
      %193 = dma.vmem_to_hbm [thread:$0]  %s191, 16, %s5, [#allocation8]
    $region9: #{tpu_custom_call.1} parent=1 // pred_fallthru
      _
    // Predicated region
    $region10: #{tpu_custom_call.1} parent=1 // pred_check
      _
    $region11: #{tpu_custom_call.1} parent=1 // pred_check_branch
      %195 = sbr.rel (0) target = $region13
    $region12: #{tpu_custom_call.1} parent=1 // pred_region
      %196 = dma.done [#allocation8], 16
    $region13: #{tpu_custom_call.1} parent=1 // pred_fallthru
      _
    %197 = vsyncpa [#allocation8], 1

</llo_original>
